<compile_context>
chip_gen: v7x
topology: tpu7x:2x2x1
jax: 0.10.0
libtpu: 0.0.40
codegen_flags: <defaults>
</compile_context>

<pallas_src>
import math

import jax
import jax.numpy as jnp
from jax.experimental import pallas as pl
from jax.experimental.pallas import tpu as pltpu


def _copy_kernel(x_ref, o_ref):
    # Pure identity copy of the current (block_rows, block_cols) tile.
    o_ref[...] = x_ref[...]


def _choose_cols(n: int) -> int:
    """Pick a lane-dense column width (multiple of 128) that divides n."""
    for c in (2048, 1024, 512, 256, 128):
        if n % c == 0:
            return c
    # Fallback for awkward sizes: any divisor <= 1024 (still correct, just
    # not lane-dense).
    for c in range(min(n, 1024), 0, -1):
        if n % c == 0:
            return c
    return 1


def pallas_squeeze(x: jax.Array) -> jax.Array:
    in_shape = tuple(x.shape)
    out_shape = tuple(d for d in in_shape if d != 1)

    # --- metadata-only fast paths (no kernel, no HBM traffic) -------------
    if out_shape == in_shape:
        # Nothing to squeeze: squeeze() is the identity.
        return x
    if out_shape == ():
        # Every dim was size 1 -> 0-d result; a 0-d Pallas output is not
        # worth lowering, just reshape.
        return jnp.reshape(x, ())
    n = math.prod(out_shape)
    if n == 0:
        # Zero-size tensor: pure metadata reshape.
        return jnp.reshape(x, out_shape)

    # --- kernel path: lane-dense 2D slab + tiled copy ---------------------
    cols = _choose_cols(n)
    rows = n // cols

    # Block shapes: either a (8,128)-aligned tile or the full dimension.
    block_rows = 512 if rows > 512 else rows          # 512 % 8 == 0
    block_cols = 512 if cols > 512 else cols          # 512 % 128 == 0

    grid = (pl.cdiv(rows, block_rows), pl.cdiv(cols, block_cols))

    # Squeezing does not change the linear element order, so reshaping the
    # raw input straight to (rows, cols) is the squeezed data.
    x2d = jnp.reshape(x, (rows, cols))

    itemsize = jnp.dtype(x.dtype).itemsize
    out2d = pl.pallas_call(
        _copy_kernel,
        out_shape=jax.ShapeDtypeStruct((rows, cols), x.dtype),
        grid=grid,
        in_specs=[pl.BlockSpec((block_rows, block_cols), lambda i, j: (i, j))],
        out_specs=pl.BlockSpec((block_rows, block_cols), lambda i, j: (i, j)),
        compiler_params=pltpu.CompilerParams(
            dimension_semantics=("parallel", "parallel")),
        cost_estimate=pl.CostEstimate(
            flops=0, transcendentals=0, bytes_accessed=2 * n * itemsize),
    )(x2d)

    return jnp.reshape(out2d, out_shape)


if __name__ == "__main__":
    key = jax.random.PRNGKey(0)
    k1, k2 = jax.random.split(key)

    # Case 1: NCHW tensor with a squeezable channel dim (typical module use).
    x1 = jax.random.normal(k1, (2, 1, 16, 16), dtype=jnp.float32)
    y1 = jax.block_until_ready(pallas_squeeze(x1))
    r1 = jnp.squeeze(x1)
    assert y1.shape == r1.shape, (y1.shape, r1.shape)
    assert y1.dtype == r1.dtype
    assert bool(jnp.array_equal(y1, r1))

    # Case 2: larger lane-dense case that exercises the tiled grid.
    x2 = jax.random.normal(k2, (4, 1, 64, 128), dtype=jnp.float32)
    y2 = jax.block_until_ready(pallas_squeeze(x2))
    r2 = jnp.squeeze(x2)
    assert y2.shape == r2.shape and bool(jnp.array_equal(y2, r2))

    # Case 3: nothing to squeeze -> identity, no kernel launched.
    x3 = jax.random.normal(k1, (2, 4, 8), dtype=jnp.float32)
    y3 = jax.block_until_ready(pallas_squeeze(x3))
    assert y3.shape == (2, 4, 8) and bool(jnp.array_equal(y3, x3))

    # Case 4: all dims size 1 -> 0-d result via metadata-only path.
    x4 = jnp.ones((1, 1, 1), dtype=jnp.float32)
    y4 = jax.block_until_ready(pallas_squeeze(x4))
    assert y4.shape == () and float(y4) == 1.0

    print("KERNEL_OK")
</pallas_src>

<mosaic_0001>
module attributes {stable_mosaic.version = 11 : i64} {
  func.func @_copy_kernel(%arg0: i32, %arg1: i32, %arg2: memref<1x512xf32, #tpu.memory_space<vmem>>, %arg3: memref<1x512xf32, #tpu.memory_space<vmem>>) attributes {dimension_semantics = [#tpu.dimension_semantics<parallel>, #tpu.dimension_semantics<parallel>], iteration_bounds = array<i64: 1, 1>, scalar_prefetch = 0 : i64, scratch_operands = 0 : i64, tpu.core_type = #tpu.core_type<tc>, window_params = [{transform_indices = @transform_0, window_bounds = array<i64: 1, 512>}, {transform_indices = @transform_1, window_bounds = array<i64: 1, 512>}]} {
    %c0 = arith.constant 0 : index
    %c0_0 = arith.constant 0 : index
    %0 = vector.load %arg2[%c0, %c0_0] : memref<1x512xf32, #tpu.memory_space<vmem>>, vector<1x512xf32>
    %c0_1 = arith.constant 0 : index
    %c0_2 = arith.constant 0 : index
    %1 = vector.load %arg3[%c0_1, %c0_2] : memref<1x512xf32, #tpu.memory_space<vmem>>, vector<1x512xf32>
    tpu.vector_store %arg3[%c0_1, %c0_2], %0 {strides = array<i32>} : memref<1x512xf32, #tpu.memory_space<vmem>>, vector<1x512xf32>,
    return
  }
  func.func @transform_0(%arg0: i32, %arg1: i32) -> (i32, i32) {
    %c0_i32 = arith.constant 0 : i32
    return %arg0, %arg1 : i32, i32
  }
  func.func @transform_1(%arg0: i32, %arg1: i32) -> (i32, i32) {
    %c0_i32 = arith.constant 0 : i32
    return %arg0, %arg1 : i32, i32
  }
}

</mosaic_0001>

<llo_original>
// kernel: tpu_custom_call.1
$region0: #{tpu_custom_call.1}
  #allocation0 [shape = 'u32[]', space=smem, size = 0x4, offset = 0x4, fixed_abs, tag = 'smem constant byte address 0x4 - core index']
  #allocation1 [shape = 'u32[144,128]{1,0:T(1,128)}', space=vmem, size = 0x12000, scoped, tag = 'internal scratch']
  %s0 = inlined_call_operand.hbm [shape: f32[1,512], index: 0, kind: input, shape index: {}]
  %s1 = inlined_call_operand.hbm [shape: f32[1,512], index: 1, kind: output, shape index: {}]
  %s2 = sld [smem:[#allocation0]]
  $region18: #{tpu_custom_call.1} parent=0
    _
  %s4 = ssub.s32 1, %s2
  %s5 = scalar_select 0, %s4, %s2
  $region1: #{tpu_custom_call.1} parent=0
    #allocation2 [shape = 'u8[2048]{0}', space=vmem, size = 0x800, scoped, tag = 'input window, operand 0, single buffered']
    #allocation3 [shape = 's32[1]{0}', space=sflag, size = 0x4, scoped, tag = 'scoped memory for tpu_custom_call.1']
    #allocation4 [shape = 's32[1]{0}', space=sflag, size = 0x4, scoped, tag = 'scoped memory for tpu_custom_call.1']
    #allocation5 [shape = 'u8[2048]{0}', space=vmem, size = 0x800, scoped, tag = 'output window, operand 0, single buffered']
    %6 = vsyncpa [#allocation3], 0
    %7 = vsyncpa [#allocation4], 0
    // Predicated region
    $region2: #{tpu_custom_call.1} parent=1 // pred_check
      _
    $region3: #{tpu_custom_call.1} parent=1 // pred_check_branch
      %9 = sbr.rel (0) target = $region5
    $region4: #{tpu_custom_call.1} parent=1 // pred_region
      %s11 = ssub.s32 64, 64
      %12 = vsyncadd [#allocation3], %s11
      %s14 = sshll.u32 [#allocation2], 4
      %s15 = int_to_ptr.vmem [resolvable:$true] %s14
      %17 = dma.hbm_to_vmem [thread:$0]  %s0, 64, %s15, [#allocation3]
    $region5: #{tpu_custom_call.1} parent=1 // pred_fallthru
      _
    // Predicated region
    $region6: #{tpu_custom_call.1} parent=1 // pred_check
      _
    $region7: #{tpu_custom_call.1} parent=1 // pred_check_branch
      %19 = sbr.rel (0) target = $region9
    $region8: #{tpu_custom_call.1} parent=1 // pred_region
      %20 = dma.done [#allocation3], 64
    $region9: #{tpu_custom_call.1} parent=1 // pred_fallthru
      _
    %v21 = vld [vmem:[#allocation2] sm:$0xf]
    %v22 = vlaneseq
    %vm23 = vcmp.ge.s32.totalorder %v22, 0
    %vm24 = vcmp.lt.s32.totalorder %v22, 512
    %vm25 = vmand %vm23, %vm24
    %26 = vst.msk [vmem:[#allocation5] sm:$0xf] %vm25, %v21
    // Predicated region
    $region10: #{tpu_custom_call.1} parent=1 // pred_check
      _
    $region11: #{tpu_custom_call.1} parent=1 // pred_check_branch
      %28 = sbr.rel (0) target = $region13
    $region12: #{tpu_custom_call.1} parent=1 // pred_region
      %s30 = ssub.s32 64, 64
      %31 = vsyncadd [#allocation4], %s30
      %s33 = sshll.u32 [#allocation5], 4
      %s34 = int_to_ptr.vmem [resolvable:$true] %s33
      %36 = dma.vmem_to_hbm [thread:$0]  %s34, 64, %s1, [#allocation4]
    $region13: #{tpu_custom_call.1} parent=1 // pred_fallthru
      _
    // Predicated region
    $region14: #{tpu_custom_call.1} parent=1 // pred_check
      _
    $region15: #{tpu_custom_call.1} parent=1 // pred_check_branch
      %38 = sbr.rel (0) target = $region17
    $region16: #{tpu_custom_call.1} parent=1 // pred_region
      %39 = dma.done [#allocation4], 64
    $region17: #{tpu_custom_call.1} parent=1 // pred_fallthru
      _
    %40 = vsyncpa [#allocation3], 1
    %41 = vsyncpa [#allocation4], 1

</llo_original>
